<compile_context>
chip_gen: v5e
topology: v5e:2x2
jax: 0.10.0
libtpu: 0.0.40
codegen_flags: <defaults>
</compile_context>

<pallas_src>
import functools

import jax
import jax.numpy as jnp
from jax.experimental import pallas as pl
from jax.experimental.pallas import tpu as pltpu

F_IN = 100    # cl_inp_size
F_HID = 128   # fc_size
LANE = 128


def _round_up(n: int, m: int) -> int:
    return ((n + m - 1) // m) * m


# ---------------------------------------------------------------------------
# Kernel: one MXU matmul per batch tile, f32 accumulation, f32 bias add/store.
# ---------------------------------------------------------------------------
def fused_linear_kernel(x_ref, w_ref, b_ref, o_ref):
    x = x_ref[...]
    w = w_ref[...]
    # In-VMEM cast (free-ish VPU op) so bf16 weights need no wrapper-side cast of x.
    acc = jnp.dot(x.astype(w.dtype), w, preferred_element_type=jnp.float32)
    o_ref[...] = (acc + b_ref[...]).astype(o_ref.dtype)


# ---------------------------------------------------------------------------
# One-time param preparation (NOT per forward call).
# ---------------------------------------------------------------------------
def fuse_params(w1, b1, w2, b2, *, compute_dtype=jnp.float32):
    """Collapse Linear -> Dropout(eval) -> Linear into (100, Np) weight + (1, Np) bias.

    Weights stored as (in, out), i.e. transpose of PyTorch's (out, in).
    Fusion is done in f32 first, then optionally narrowed (avoids compounding bf16 error).
    Returns (w_padded, b_padded, num_classes).
    """
    C = w2.shape[1]
    Np = _round_up(C, LANE)
    w1f = w1.astype(jnp.float32)
    w2f = w2.astype(jnp.float32)
    w_fused = w1f @ w2f                                    # (100, C)
    b_fused = b1.astype(jnp.float32) @ w2f + b2.astype(jnp.float32)   # (1, C)
    w_p = jnp.pad(w_fused, ((0, 0), (0, Np - C))).astype(compute_dtype)
    b_p = jnp.pad(b_fused, ((0, 0), (0, Np - C))).astype(jnp.float32)
    return w_p, b_p, C


def _pick_tb(B: int, block_b: int) -> int:
    """Adaptive batch tile: big enough to amortize per-step overhead, >=2 tiles for v7x."""
    target = _round_up(min(block_b, 4096), 8)
    if B > target:
        return target
    if B >= 512:
        # Split into at least 2 tiles so the "parallel" axis feeds both v7x TensorCores
        # (no-op on v5e/v6e); keep second-last block dim a multiple of 8.
        return _round_up(pl.cdiv(B, 2), 8)
    # Small batch: one full block; exact array dims need no (8,128) divisibility.
    return B


@functools.partial(jax.jit, static_argnames=("num_classes", "block_b"))
def _senfier_ml_apply(x, w_p, b_p, *, num_classes, block_b=4096):
    B, K = x.shape
    assert K == F_IN, f"expected last dim {F_IN}, got {K}"
    Np = w_p.shape[1]

    tb = _pick_tb(B, block_b)
    grid = (pl.cdiv(B, tb),)

    out = pl.pallas_call(
        fused_linear_kernel,
        out_shape=jax.ShapeDtypeStruct((B, Np), jnp.float32),
        grid=grid,
        in_specs=[
            # x streamed per batch tile; K=100 == full array dim -> no padding needed.
            pl.BlockSpec((tb, F_IN), lambda i: (i, 0)),
            # Fused weight / bias resident across the whole grid (constant index_map).
            pl.BlockSpec((F_IN, Np), lambda i: (0, 0)),
            pl.BlockSpec((1, Np), lambda i: (0, 0)),
        ],
        # Lane-dense (Np = 128) output; partial last batch tile handled by masked stores.
        out_specs=pl.BlockSpec((tb, Np), lambda i: (i, 0)),
        compiler_params=pltpu.CompilerParams(
            dimension_semantics=("parallel",),  # independent batch tiles
        ),
    )(x, w_p, b_p)

    return out[:, :num_classes]


# ---------------------------------------------------------------------------
# Convenience wrapper (fuses params per call; for serving, call fuse_params once
# and reuse _senfier_ml_apply directly).
# ---------------------------------------------------------------------------
def senfier_ml_forward(x, w1, b1, w2, b2, *, compute_dtype=jnp.float32,
                       block_b=4096, training=False):
    if training:
        # TODO(synk): training-mode Dropout(p=0.2) (pltpu.prng_random_bits mask between the
        # two matmuls) is not implemented; the algebraic fusion is only valid in eval mode.
        raise NotImplementedError("Fused SenFier_ML kernel is eval-mode only.")
    w_p, b_p, C = fuse_params(w1, b1, w2, b2, compute_dtype=compute_dtype)
    return _senfier_ml_apply(x, w_p, b_p, num_classes=C, block_b=block_b)


def init_params(key, num_classes):
    # Deterministic init mimicking nn.Linear's U(-1/sqrt(fan_in), 1/sqrt(fan_in)).
    k1, k2, k3, k4 = jax.random.split(key, 4)
    bound1 = 1.0 / jnp.sqrt(F_IN)
    bound2 = 1.0 / jnp.sqrt(F_HID)
    # Stored as (in, out) = transpose of PyTorch's (out, in) weight.
    w1 = jax.random.uniform(k1, (F_IN, F_HID), jnp.float32, -bound1, bound1)
    b1 = jax.random.uniform(k2, (1, F_HID), jnp.float32, -bound1, bound1)
    w2 = jax.random.uniform(k3, (F_HID, num_classes), jnp.float32, -bound2, bound2)
    b2 = jax.random.uniform(k4, (1, num_classes), jnp.float32, -bound2, bound2)
    return w1, b1, w2, b2


if __name__ == "__main__":
    num_classes = 10
    batch = 8

    key = jax.random.PRNGKey(0)
    kx, kp = jax.random.split(key)
    x = jax.random.normal(kx, (batch, F_IN), jnp.float32)
    w1, b1, w2, b2 = init_params(kp, num_classes)

    # Pure-JAX reference (eval-mode dropout == identity), un-fused two-matmul form.
    ref = (x @ w1 + b1) @ w2 + b2

    # f32 path: strict parity with the PyTorch f32 model.
    out = senfier_ml_forward(x, w1, b1, w2, b2)
    out = jax.block_until_ready(out)
    assert out.shape == (batch, num_classes)
    assert jnp.allclose(out, ref, atol=1e-4, rtol=1e-4)

    # bf16 fused weights (f32 accumulation) -- throughput path.
    out_bf16 = senfier_ml_forward(x, w1, b1, w2, b2, compute_dtype=jnp.bfloat16)
    out_bf16 = jax.block_until_ready(out_bf16)
    assert jnp.allclose(out_bf16, ref, atol=5e-2, rtol=5e-2)

    # Non-tile-aligned larger batch: exercises adaptive tiling (grid >= 2) + masked
    # partial last tile, with NO batch padding and NO extra pass over x.
    xb = jax.random.normal(kx, (1037, F_IN), jnp.float32)
    refb = (xb @ w1 + b1) @ w2 + b2
    w_p, b_p, C = fuse_params(w1, b1, w2, b2)           # hoisted param fusion (once)
    outb = jax.block_until_ready(_senfier_ml_apply(xb, w_p, b_p, num_classes=C))
    assert outb.shape == (1037, num_classes)
    assert jnp.allclose(outb, refb, atol=1e-4, rtol=1e-4)

    print("KERNEL_OK")
</pallas_src>

<mosaic_0001>
module attributes {stable_mosaic.version = 11 : i64} {
  func.func @fused_linear_kernel(%arg0: i32, %arg1: memref<8x100xf32, #tpu.memory_space<vmem>>, %arg2: memref<100x128xf32, #tpu.memory_space<vmem>>, %arg3: memref<1x128xf32, #tpu.memory_space<vmem>>, %arg4: memref<8x128xf32, #tpu.memory_space<vmem>>) attributes {dimension_semantics = [#tpu.dimension_semantics<parallel>], iteration_bounds = array<i64: 1>, scalar_prefetch = 0 : i64, scratch_operands = 0 : i64, tpu.core_type = #tpu.core_type<tc>, window_params = [{transform_indices = @transform_0, window_bounds = array<i64: 8, 100>}, {pipeline_mode = #tpu.pipeline_mode<synchronous>, transform_indices = @transform_1, window_bounds = array<i64: 100, 128>}, {pipeline_mode = #tpu.pipeline_mode<synchronous>, transform_indices = @transform_2, window_bounds = array<i64: 1, 128>}, {transform_indices = @transform_3, window_bounds = array<i64: 8, 128>}]} {
    %c0 = arith.constant 0 : index
    %c0_0 = arith.constant 0 : index
    %0 = vector.load %arg1[%c0, %c0_0] : memref<8x100xf32, #tpu.memory_space<vmem>>, vector<8x100xf32>
    %c0_1 = arith.constant 0 : index
    %c0_2 = arith.constant 0 : index
    %1 = vector.load %arg2[%c0_1, %c0_2] : memref<100x128xf32, #tpu.memory_space<vmem>>, vector<100x128xf32>
    %cst = arith.constant dense<0.000000e+00> : vector<8x128xf32>
    %2 = tpu.matmul %0, %1, %cst {dimension_numbers = #tpu.dot_dimension_numbers<[1], [0], [0], [1], [0, 0, 1, 1], [], []>} : vector<8x100xf32>, vector<100x128xf32>, vector<8x128xf32> -> vector<8x128xf32>
    %c0_3 = arith.constant 0 : index
    %c0_4 = arith.constant 0 : index
    %3 = vector.load %arg3[%c0_3, %c0_4] : memref<1x128xf32, #tpu.memory_space<vmem>>, vector<1x128xf32>
    %4 = vector.broadcast %3 : vector<1x128xf32> to vector<8x128xf32>
    %5 = arith.addf %2, %4 : vector<8x128xf32>
    %c0_5 = arith.constant 0 : index
    %c0_6 = arith.constant 0 : index
    %6 = vector.load %arg4[%c0_5, %c0_6] : memref<8x128xf32, #tpu.memory_space<vmem>>, vector<8x128xf32>
    tpu.vector_store %arg4[%c0_5, %c0_6], %5 {strides = array<i32>} : memref<8x128xf32, #tpu.memory_space<vmem>>, vector<8x128xf32>,
    return
  }
  func.func @transform_0(%arg0: i32) -> (i32, i32) {
    %c0_i32 = arith.constant 0 : i32
    %c0_i32_0 = arith.constant 0 : i32
    return %arg0, %c0_i32 : i32, i32
  }
  func.func @transform_1(%arg0: i32) -> (i32, i32) {
    %c0_i32 = arith.constant 0 : i32
    %c0_i32_0 = arith.constant 0 : i32
    %c0_i32_1 = arith.constant 0 : i32
    return %c0_i32, %c0_i32_0 : i32, i32
  }
  func.func @transform_2(%arg0: i32) -> (i32, i32) {
    %c0_i32 = arith.constant 0 : i32
    %c0_i32_0 = arith.constant 0 : i32
    %c0_i32_1 = arith.constant 0 : i32
    return %c0_i32, %c0_i32_0 : i32, i32
  }
  func.func @transform_3(%arg0: i32) -> (i32, i32) {
    %c0_i32 = arith.constant 0 : i32
    %c0_i32_0 = arith.constant 0 : i32
    return %arg0, %c0_i32 : i32, i32
  }
}

</mosaic_0001>

<llo_original>
// kernel: _senfier_ml_apply.1
$region0: #{_senfier_ml_apply.1}
  #allocation0 [shape = 'u32[]', space=smem, size = 0x4, offset = 0x4, fixed_abs, tag = 'smem constant byte address 0x4 - core index']
  #allocation1 [shape = 'u32[72,128]{1,0:T(1,128)}', space=vmem, size = 0x9000, scoped, tag = 'internal scratch']
  %s0 = inlined_call_operand.hbm [shape: f32[8,100], index: 0, kind: input, shape index: {}]
  %s1 = inlined_call_operand.hbm [shape: f32[100,128], index: 1, kind: input, shape index: {}]
  %s2 = inlined_call_operand.vmem [shape: f32[1,128], index: 2, kind: input, shape index: {}]
  %s3 = inlined_call_operand.hbm [shape: f32[8,128], index: 3, kind: output, shape index: {}]
  %s4 = sld [smem:[#allocation0]]
  $region30: #{_senfier_ml_apply.1} parent=0
    _
  %s6 = ssub.s32 1, %s4
  %s7 = scalar_select 0, %s6, %s4
  $region1: #{_senfier_ml_apply.1} parent=0
    #allocation2 [shape = 'u8[4096]{0}', space=vmem, size = 0x1000, scoped, tag = 'input window, operand 0, single buffered']
    #allocation3 [shape = 's32[1]{0}', space=sflag, size = 0x4, scoped, tag = 'scoped memory for _senfier_ml_apply.1']
    #allocation4 [shape = 's32[1]{0}', space=sflag, size = 0x4, scoped, tag = 'scoped memory for _senfier_ml_apply.1']
    #allocation5 [shape = 'u8[53248]{0}', space=vmem, size = 0xd000, scoped, tag = 'input window, operand 1, single buffered']
    #allocation6 [shape = 's32[1]{0}', space=sflag, size = 0x4, scoped, tag = 'scoped memory for _senfier_ml_apply.1']
    #allocation7 [shape = 'u8[4096]{0}', space=vmem, size = 0x1000, scoped, tag = 'output window, operand 0, single buffered']
    %8 = vsyncpa [#allocation3], 0
    %9 = vsyncpa [#allocation6], 0
    %10 = vsyncpa [#allocation4], 0
    // Predicated region
    $region2: #{_senfier_ml_apply.1} parent=1 // pred_check
      _
    $region3: #{_senfier_ml_apply.1} parent=1 // pred_check_branch
      %12 = sbr.rel (0) target = $region5
    $region4: #{_senfier_ml_apply.1} parent=1 // pred_region
      %14 = vsyncadd [#allocation3], 0
      %s16 = sshll.u32 %s0, 4
      %s17 = int_to_ptr.hbm [resolvable:$true] %s16
      %s18 = sshll.u32 [#allocation2], 4
      %s19 = int_to_ptr.vmem [resolvable:$true] %s18
      %21 = dma.hbm_to_vmem [thread:$0]  %s17, 128, %s19, [#allocation3]
    $region5: #{_senfier_ml_apply.1} parent=1 // pred_fallthru
      _
    // Predicated region
    $region6: #{_senfier_ml_apply.1} parent=1 // pred_check
      _
    $region7: #{_senfier_ml_apply.1} parent=1 // pred_check_branch
      %23 = sbr.rel (0) target = $region9
    $region8: #{_senfier_ml_apply.1} parent=1 // pred_region
      %25 = vsyncadd [#allocation6], 0
      %s26 = sshll.u32 %s1, 4
      %s27 = int_to_ptr.hbm [resolvable:$true] %s26
      %s28 = sshll.u32 [#allocation5], 4
      %s29 = int_to_ptr.vmem [resolvable:$true] %s28
      %34 = dma.hbm_to_vmem [thread:$0]  %s27, 1664, %s29, [#allocation6], 128, 128, 8
    $region9: #{_senfier_ml_apply.1} parent=1 // pred_fallthru
      _
    // Predicated region
    $region10: #{_senfier_ml_apply.1} parent=1 // pred_check
      _
    $region11: #{_senfier_ml_apply.1} parent=1 // pred_check_branch
      %36 = sbr.rel (0) target = $region13
    $region12: #{_senfier_ml_apply.1} parent=1 // pred_region
      _
    $region13: #{_senfier_ml_apply.1} parent=1 // pred_fallthru
      _
    // Predicated region
    $region14: #{_senfier_ml_apply.1} parent=1 // pred_check
      _
    $region15: #{_senfier_ml_apply.1} parent=1 // pred_check_branch
      %38 = sbr.rel (0) target = $region17
    $region16: #{_senfier_ml_apply.1} parent=1 // pred_region
      %40 = dma.done [#allocation3], 128
    $region17: #{_senfier_ml_apply.1} parent=1 // pred_fallthru
      _
    // Predicated region
    $region18: #{_senfier_ml_apply.1} parent=1 // pred_check
      _
    $region19: #{_senfier_ml_apply.1} parent=1 // pred_check_branch
      %42 = sbr.rel (0) target = $region21
    $region20: #{_senfier_ml_apply.1} parent=1 // pred_region
      %44 = dma.done [#allocation6], 1664
    $region21: #{_senfier_ml_apply.1} parent=1 // pred_fallthru
      _
    %v45 = vld [vmem:[#allocation2] sm:$0xff]
    %v46 = vld [vmem:[#allocation5] sm:$0xff]
    %v47 = vld [vmem:[#allocation5 + $0x8] sm:$0xff]
    %v48 = vld [vmem:[#allocation5 + $0x10] sm:$0xff]
    %v49 = vld [vmem:[#allocation5 + $0x18] sm:$0xff]
    %v50 = vld [vmem:[#allocation5 + $0x20] sm:$0xff]
    %v51 = vld [vmem:[#allocation5 + $0x28] sm:$0xff]
    %v52 = vld [vmem:[#allocation5 + $0x30] sm:$0xff]
    %v53 = vld [vmem:[#allocation5 + $0x38] sm:$0xff]
    %v54 = vld [vmem:[#allocation5 + $0x40] sm:$0xff]
    %v55 = vld [vmem:[#allocation5 + $0x48] sm:$0xff]
    %v56 = vld [vmem:[#allocation5 + $0x50] sm:$0xff]
    %v57 = vld [vmem:[#allocation5 + $0x58] sm:$0xff]
    %v58 = vld [vmem:[#allocation5 + $0x60] sm:$0xf]
    %v59 = vld [vmem:[%s2] sm:$0x1]
    %v61 = vperm.slane %v59, 0
    %vm63 = vcmask 818176
    %v65 = vsel %vm63, %v45, 0
    %vm67 = vcmask 1043456
    %v69 = vsel %vm67, %v58, 0
    %71 = vmatpush.msra.mxu0 0.0
    %72 = vmatpush.msra.mxu0 0.0
    %73 = vmatpush.msra.mxu0 0.0
    %74 = vmatpush.msra.mxu0 %v69
    %75 = vmatpush.msra.mxu0 %v57
    %76 = vmatpush.msra.mxu0 %v56
    %77 = vmatpush.msra.mxu0 %v55
    %78 = vmatpush.msra.mxu0 %v54
    %79 = vmatpush.msra.mxu0 %v53
    %80 = vmatpush.msra.mxu0 %v52
    %81 = vmatpush.msra.mxu0 %v51
    %82 = vmatpush.msra.mxu0 %v50
    %83 = vmatpush.msra.mxu0 %v49
    %84 = vmatpush.msra.mxu0 %v48
    %85 = vmatpush.msra.mxu0 %v47
    %86 = vmatpush.msra.mxu0 %v46
    %87 = vmatmul.f32.gmra.mxu0 %v65
    %v88 = vpop.f32.mrf.mxu0
    %v89 = vadd.f32 %v61, %v88
    %90 = vdwg.mxu0
    %91 = vst [vmem:[#allocation7] sm:$0xff] %v89
    // Predicated region
    $region22: #{_senfier_ml_apply.1} parent=1 // pred_check
      _
    $region23: #{_senfier_ml_apply.1} parent=1 // pred_check_branch
      %93 = sbr.rel (0) target = $region25
    $region24: #{_senfier_ml_apply.1} parent=1 // pred_region
      %95 = vsyncadd [#allocation4], 0
      %s97 = sshll.u32 [#allocation7], 4
      %s98 = int_to_ptr.vmem [resolvable:$true] %s97
      %s99 = sshll.u32 %s3, 4
      %s100 = int_to_ptr.hbm [resolvable:$true] %s99
      %102 = dma.vmem_to_hbm [thread:$0]  %s98, 128, %s100, [#allocation4]
    $region25: #{_senfier_ml_apply.1} parent=1 // pred_fallthru
      _
    // Predicated region
    $region26: #{_senfier_ml_apply.1} parent=1 // pred_check
      _
    $region27: #{_senfier_ml_apply.1} parent=1 // pred_check_branch
      %104 = sbr.rel (0) target = $region29
    $region28: #{_senfier_ml_apply.1} parent=1 // pred_region
      %106 = dma.done [#allocation4], 128
    $region29: #{_senfier_ml_apply.1} parent=1 // pred_fallthru
      _
    %107 = vsyncpa [#allocation3], 1
    %108 = vsyncpa [#allocation6], 1
    %109 = vsyncpa [#allocation4], 1

</llo_original>
